<compile_context>
chip_gen: v6e
topology: v6e:2x2x1
jax: 0.10.0
libtpu: 0.0.40
codegen_flags: <defaults>
</compile_context>

<pallas_src>
import functools

import jax
import jax.numpy as jnp
from jax.experimental import pallas as pl
from jax.experimental.pallas import tpu as pltpu

_LANE = 128
_SUBLANE = 8
_FUSED_VMEM_BUDGET = 28 * 1024 * 1024   # stay under the 32 MiB scoped default


# ---------------------------------------------------------------------------
# Fused path: pool + excitation MLP + scale for one whole sample per grid step
# ---------------------------------------------------------------------------
def _fused_kernel(x_ref, w1t_ref, w2_ref, o_ref, *, inv_hw):
    # x_ref/o_ref: (C, HW) in the input dtype (batch dim squeezed by BlockSpec)
    # w1t_ref:     (C, Cr) fp32   (= w1.T,  first Linear, PyTorch (Cr, C))
    # w2_ref:      (C, Cr) fp32   (second Linear, PyTorch layout (C, Cr))
    x = x_ref[...]
    # Global average pool (fp32 accumulate, precomputed 1/HW).
    p = jnp.sum(x.astype(jnp.float32), axis=-1, keepdims=True) * inv_hw   # (C, 1)
    # Excitation MLP as broadcast-multiply + reduce (tiny; no MXU needed).
    h = jnp.maximum(jnp.sum(w1t_ref[...] * p, axis=0, keepdims=True), 0.0)  # (1, Cr)
    g = jnp.sum(w2_ref[...] * h, axis=-1, keepdims=True)                    # (C, 1)
    gate = (1.0 / (1.0 + jnp.exp(-g))).astype(o_ref.dtype)                  # (C, 1)
    # Channel-wise scale in the input dtype.
    o_ref[...] = x * gate


def _se_fused(x, w1, w2):
    B, C, H, W = x.shape
    HW = H * W
    Cr = w1.shape[0]

    x3 = x.reshape(B, C, HW)                     # free reshape (contiguous)
    w1t = w1.T.astype(jnp.float32)               # (C, Cr)
    w2f = w2.astype(jnp.float32)                 # (C, Cr)

    out = pl.pallas_call(
        functools.partial(_fused_kernel, inv_hw=1.0 / HW),
        out_shape=jax.ShapeDtypeStruct((B, C, HW), x.dtype),
        grid_spec=pltpu.PrefetchScalarGridSpec(
            num_scalar_prefetch=0,
            grid=(B,),
            in_specs=[
                pl.BlockSpec((None, C, HW), lambda b: (b, 0, 0)),   # full slab
                pl.BlockSpec((C, Cr), lambda b: (0, 0)),
                pl.BlockSpec((C, Cr), lambda b: (0, 0)),
            ],
            out_specs=pl.BlockSpec((None, C, HW), lambda b: (b, 0, 0)),
        ),
        compiler_params=pltpu.CompilerParams(
            dimension_semantics=("parallel",)),
    )(x3, w1t, w2f)

    return out.reshape(B, C, H, W)


# ---------------------------------------------------------------------------
# Two-pass fallback (large slabs): pool kernel + XLA MLP + scale kernel
# ---------------------------------------------------------------------------
def _pool_kernel(x_ref, o_ref, *, inv_hw, hw, t_hw, ragged):
    # x_ref: (R, T) tile of the (B*C, HW) view;  o_ref: (R, 1) fp32 accumulator
    k = pl.program_id(1)

    @pl.when(k == 0)
    def _():
        o_ref[...] = jnp.zeros_like(o_ref)

    xv = x_ref[...].astype(jnp.float32)
    if ragged:
        # Last HW tile may extend past HW: zero the out-of-range lanes.
        lane = jax.lax.broadcasted_iota(jnp.int32, xv.shape, dimension=1)
        xv = jnp.where(lane + k * t_hw < hw, xv, 0.0)
    o_ref[...] += jnp.sum(xv, axis=-1, keepdims=True)

    @pl.when(k == pl.num_programs(1) - 1)
    def _():
        o_ref[...] *= inv_hw


def _scale_kernel(x_ref, g_ref, o_ref):
    # Bare load-mul-store; gate already cast to the input dtype in XLA.
    o_ref[...] = x_ref[...] * g_ref[...]


def _pick_row_tile(bc, row_bytes, budget):
    """Largest multiple-of-8 divisor of bc with R*row_bytes <= budget."""
    if bc % _SUBLANE != 0:
        return bc  # full extent waives the sublane-divisibility rule (rare here)
    cap = max(_SUBLANE, budget // max(row_bytes, 1))
    cap = min(bc, cap // _SUBLANE * _SUBLANE)
    for r in range(cap, _SUBLANE - 1, -_SUBLANE):
        if bc % r == 0:
            return r
    return _SUBLANE


def _se_two_pass(x, w1, w2, tile_bytes):
    B, C, H, W = x.shape
    HW = H * W
    BC = B * C
    itemsize = jnp.dtype(x.dtype).itemsize

    x2d = x.reshape(BC, HW)                      # free reshape (contiguous)
    row_bytes = HW * itemsize

    if _SUBLANE * row_bytes <= tile_bytes:
        # Full-HW row blocks: one contiguous DMA per block, no masking needed.
        T, n_hw, ragged = HW, 1, False
        R = _pick_row_tile(BC, row_bytes, tile_bytes)
    else:
        # Huge spatial size: tile HW with lane-dense blocks, mask ragged tail.
        R = _SUBLANE if BC % _SUBLANE == 0 else BC
        T = max(_LANE, (tile_bytes // (R * itemsize)) // _LANE * _LANE)
        n_hw = pl.cdiv(HW, T)
        ragged = (HW % T) != 0
    grid_rows = BC // R

    # --- pass 1: global average pool ---------------------------------------
    pooled = pl.pallas_call(
        functools.partial(_pool_kernel, inv_hw=1.0 / HW, hw=HW, t_hw=T,
                          ragged=ragged),
        out_shape=jax.ShapeDtypeStruct((BC, 1), jnp.float32),
        grid_spec=pltpu.PrefetchScalarGridSpec(
            num_scalar_prefetch=0,
            grid=(grid_rows, n_hw),
            in_specs=[pl.BlockSpec((R, T), lambda r, k: (r, k))],
            out_specs=pl.BlockSpec((R, 1), lambda r, k: (r, 0)),
        ),
        compiler_params=pltpu.CompilerParams(
            dimension_semantics=("parallel", "arbitrary")),
    )(x2d)

    # --- excitation MLP, batched over all B (tiny; hoisted to XLA) ----------
    y = pooled.reshape(B, C)                                 # (B, C) fp32
    h = jnp.maximum(y @ w1.T.astype(jnp.float32), 0.0)       # (B, C//r)
    gate = jax.nn.sigmoid(h @ w2.T.astype(jnp.float32))      # (B, C)
    gate2d = gate.reshape(BC, 1).astype(x.dtype)             # pre-cast for pass 2

    # --- pass 2: channel-wise scale (mem-bound, lane-dense blocks) ----------
    out2d = pl.pallas_call(
        _scale_kernel,
        out_shape=jax.ShapeDtypeStruct((BC, HW), x.dtype),
        grid_spec=pltpu.PrefetchScalarGridSpec(
            num_scalar_prefetch=0,
            grid=(grid_rows, n_hw),
            in_specs=[pl.BlockSpec((R, T), lambda r, k: (r, k)),
                      pl.BlockSpec((R, 1), lambda r, k: (r, 0))],
            out_specs=pl.BlockSpec((R, T), lambda r, k: (r, k)),
        ),
        compiler_params=pltpu.CompilerParams(
            dimension_semantics=("parallel", "parallel")),
    )(x2d, gate2d)

    return out2d.reshape(B, C, H, W)


# ---------------------------------------------------------------------------
# Public entry point
# ---------------------------------------------------------------------------
def se_attention(x, w1, w2, *, tile_bytes=2 * 1024 * 1024, force_two_pass=False):
    """x: (B, C, H, W); w1: (C//r, C); w2: (C, C//r) — PyTorch Linear layouts."""
    B, C, H, W = x.shape
    HW = H * W
    itemsize = jnp.dtype(x.dtype).itemsize
    slab = C * HW * itemsize
    # Fused-path working-set estimate: double-buffered in + out sample blocks
    # plus fp32 temporaries.  Keep it under the 32 MiB default scoped-VMEM
    # limit so the same call works on v5e/v6e/v7x without overrides.
    est = 4 * slab + 3 * C * HW * 4
    if (not force_two_pass) and est <= _FUSED_VMEM_BUDGET:
        return _se_fused(x, w1, w2)
    return _se_two_pass(x, w1, w2, tile_bytes)


def se_attention_ref(x, w1, w2):
    """Pure-JAX reference mirroring the PyTorch forward."""
    y = jnp.mean(x, axis=(2, 3))                    # (B, C)
    h = jnp.maximum(y @ w1.T, 0.0)                  # (B, C//r)
    s = jax.nn.sigmoid(h @ w2.T)                    # (B, C)
    return x * s[:, :, None, None]


if __name__ == "__main__":
    B, C, H, W = 2, 32, 16, 16
    reduction = 4                 # SEAttention(channel, reduction=4) as in Stage
    C_r = C // reduction

    key = jax.random.PRNGKey(0)
    kx, k1, k2 = jax.random.split(key, 3)

    x = jax.random.normal(kx, (B, C, H, W), dtype=jnp.float32)
    # init_weights(): Linear weights ~ normal(std=0.001), no bias.
    w1 = 0.001 * jax.random.normal(k1, (C_r, C), dtype=jnp.float32)
    w2 = 0.001 * jax.random.normal(k2, (C, C_r), dtype=jnp.float32)

    ref = se_attention_ref(x, w1, w2)

    # 1) Fused single-pass path (default for slabs that fit VMEM).
    out_fused = jax.block_until_ready(se_attention(x, w1, w2))
    assert out_fused.shape == (B, C, H, W)
    assert jnp.allclose(out_fused, ref, atol=1e-5, rtol=1e-5), "fused mismatch"

    # 2) Two-pass fallback, full-HW row blocks (no padding, no masking).
    out_tp = jax.block_until_ready(se_attention(x, w1, w2, force_two_pass=True))
    assert jnp.allclose(out_tp, ref, atol=1e-5, rtol=1e-5), "two-pass mismatch"

    # 3) Two-pass fallback with HW tiling and a ragged (non-128) tail.
    x_r = jax.random.normal(kx, (B, C, 13, 13), dtype=jnp.float32)
    ref_r = se_attention_ref(x_r, w1, w2)
    out_r = jax.block_until_ready(
        se_attention(x_r, w1, w2, force_two_pass=True, tile_bytes=4096))
    assert jnp.allclose(out_r, ref_r, atol=1e-5, rtol=1e-5), "ragged mismatch"

    print("KERNEL_OK")
</pallas_src>

<mosaic_0001>
module attributes {stable_mosaic.version = 11 : i64} {
  func.func @_fused_kernel(%arg0: i32, %arg1: memref<1x32x256xf32, #tpu.memory_space<vmem>>, %arg2: memref<32x8xf32, #tpu.memory_space<vmem>>, %arg3: memref<32x8xf32, #tpu.memory_space<vmem>>, %arg4: memref<1x32x256xf32, #tpu.memory_space<vmem>>) attributes {dimension_semantics = [#tpu.dimension_semantics<parallel>], iteration_bounds = array<i64: 2>, scalar_prefetch = 0 : i64, scratch_operands = 0 : i64, tpu.core_type = #tpu.core_type<tc>, window_params = [{transform_indices = @transform_0, window_bounds = array<i64: 1, 32, 256>}, {pipeline_mode = #tpu.pipeline_mode<synchronous>, transform_indices = @transform_1, window_bounds = array<i64: 32, 8>}, {pipeline_mode = #tpu.pipeline_mode<synchronous>, transform_indices = @transform_2, window_bounds = array<i64: 32, 8>}, {transform_indices = @transform_3, window_bounds = array<i64: 1, 32, 256>}]} {
    %c0 = arith.constant 0 : index
    %c0_0 = arith.constant 0 : index
    %c0_1 = arith.constant 0 : index
    %0 = vector.load %arg1[%c0, %c0_0, %c0_1] : memref<1x32x256xf32, #tpu.memory_space<vmem>>, vector<1x32x256xf32>
    %1 = vector.shape_cast %0 : vector<1x32x256xf32> to vector<32x256xf32>
    %cst = arith.constant dense<0.000000e+00> : vector<32xf32>
    %2 = vector.multi_reduction <add>, %1, %cst [1] : vector<32x256xf32> to vector<32xf32>
    %3 = vector.shape_cast %2 : vector<32xf32> to vector<32x1xf32>
    %cst_2 = arith.constant 3.906250e-03 : f32
    %4 = vector.broadcast %cst_2 : f32 to vector<32x1xf32>
    %5 = arith.mulf %3, %4 : vector<32x1xf32>
    %c0_3 = arith.constant 0 : index
    %c0_4 = arith.constant 0 : index
    %6 = vector.load %arg2[%c0_3, %c0_4] : memref<32x8xf32, #tpu.memory_space<vmem>>, vector<32x8xf32>
    %7 = vector.broadcast %5 : vector<32x1xf32> to vector<32x8xf32>
    %8 = arith.mulf %6, %7 : vector<32x8xf32>
    %cst_5 = arith.constant dense<0.000000e+00> : vector<8xf32>
    %9 = vector.multi_reduction <add>, %8, %cst_5 [0] : vector<32x8xf32> to vector<8xf32>
    %10 = vector.shape_cast %9 : vector<8xf32> to vector<1x8xf32>
    %cst_6 = arith.constant 0.000000e+00 : f32
    %11 = vector.broadcast %cst_6 : f32 to vector<1x8xf32>
    %12 = arith.maximumf %10, %11 : vector<1x8xf32>
    %c0_7 = arith.constant 0 : index
    %c0_8 = arith.constant 0 : index
    %13 = vector.load %arg3[%c0_7, %c0_8] : memref<32x8xf32, #tpu.memory_space<vmem>>, vector<32x8xf32>
    %14 = vector.broadcast %12 : vector<1x8xf32> to vector<32x8xf32>
    %15 = arith.mulf %13, %14 : vector<32x8xf32>
    %cst_9 = arith.constant dense<0.000000e+00> : vector<32xf32>
    %16 = vector.multi_reduction <add>, %15, %cst_9 [1] : vector<32x8xf32> to vector<32xf32>
    %17 = vector.shape_cast %16 : vector<32xf32> to vector<32x1xf32>
    %cst_10 = arith.constant 0.000000e+00 : f32
    %18 = vector.broadcast %cst_10 : f32 to vector<32x1xf32>
    %19 = arith.subf %18, %17 : vector<32x1xf32>
    %20 = math.exp %19 : vector<32x1xf32>
    %cst_11 = arith.constant 1.000000e+00 : f32
    %21 = vector.broadcast %cst_11 : f32 to vector<32x1xf32>
    %22 = arith.addf %21, %20 : vector<32x1xf32>
    %cst_12 = arith.constant 1.000000e+00 : f32
    %23 = vector.broadcast %cst_12 : f32 to vector<32x1xf32>
    %24 = arith.divf %23, %22 : vector<32x1xf32>
    %25 = vector.broadcast %24 : vector<32x1xf32> to vector<32x256xf32>
    %26 = arith.mulf %1, %25 : vector<32x256xf32>
    %c0_13 = arith.constant 0 : index
    %c0_14 = arith.constant 0 : index
    %c0_15 = arith.constant 0 : index
    %27 = vector.load %arg4[%c0_13, %c0_14, %c0_15] : memref<1x32x256xf32, #tpu.memory_space<vmem>>, vector<1x32x256xf32>
    %28 = vector.shape_cast %27 : vector<1x32x256xf32> to vector<32x256xf32>
    %29 = vector.shape_cast %26 : vector<32x256xf32> to vector<1x32x256xf32>
    tpu.vector_store %arg4[%c0_13, %c0_14, %c0_15], %29 {strides = array<i32>} : memref<1x32x256xf32, #tpu.memory_space<vmem>>, vector<1x32x256xf32>,
    return
  }
  func.func @transform_0(%arg0: i32) -> (i32, i32, i32) {
    %c0_i32 = arith.constant 0 : i32
    %c0_i32_0 = arith.constant 0 : i32
    %c0_i32_1 = arith.constant 0 : i32
    return %arg0, %c0_i32, %c0_i32_0 : i32, i32, i32
  }
  func.func @transform_1(%arg0: i32) -> (i32, i32) {
    %c0_i32 = arith.constant 0 : i32
    %c0_i32_0 = arith.constant 0 : i32
    %c0_i32_1 = arith.constant 0 : i32
    return %c0_i32, %c0_i32_0 : i32, i32
  }
  func.func @transform_2(%arg0: i32) -> (i32, i32) {
    %c0_i32 = arith.constant 0 : i32
    %c0_i32_0 = arith.constant 0 : i32
    %c0_i32_1 = arith.constant 0 : i32
    return %c0_i32, %c0_i32_0 : i32, i32
  }
  func.func @transform_3(%arg0: i32) -> (i32, i32, i32) {
    %c0_i32 = arith.constant 0 : i32
    %c0_i32_0 = arith.constant 0 : i32
    %c0_i32_1 = arith.constant 0 : i32
    return %arg0, %c0_i32, %c0_i32_0 : i32, i32, i32
  }
}

</mosaic_0001>

<llo_original>
// kernel: tpu_custom_call.1
$region0: #{tpu_custom_call.1}
  #allocation0 [shape = 'u32[]', space=smem, size = 0x4, offset = 0x4, fixed_abs, tag = 'smem constant byte address 0x4 - core index']
  #allocation1 [shape = 'u32[144,128]{1,0:T(1,128)}', space=vmem, size = 0x12000, scoped, tag = 'internal scratch']
  %s0 = inlined_call_operand.hbm [shape: f32[2,32,256], index: 0, kind: input, shape index: {}]
  %s1 = inlined_call_operand.vmem [shape: f32[32,8], index: 1, kind: input, shape index: {}]
  %s2 = inlined_call_operand.vmem [shape: f32[32,8], index: 2, kind: input, shape index: {}]
  %s3 = inlined_call_operand.hbm [shape: f32[2,32,256], index: 3, kind: output, shape index: {}]
  %s4 = sld [smem:[#allocation0]]
  $region49: #{tpu_custom_call.1} parent=0
    _
  %s6 = ssub.s32 1, %s4
  %s7 = scalar_select 0, %s6, %s4
  $region1: #{tpu_custom_call.1} parent=0
    #allocation2 [shape = 'u8[65536]{0}', space=vmem, size = 0x10000, scoped, tag = 'input window, operand 0']
    #allocation3 [shape = 's32[2]{0}', space=sflag, size = 0x8, scoped, tag = 'scoped memory for tpu_custom_call.1']
    #allocation4 [shape = 's32[2]{0}', space=sflag, size = 0x8, scoped, tag = 'scoped memory for tpu_custom_call.1']
    #allocation5 [shape = 'u8[65536]{0}', space=vmem, size = 0x10000, scoped, tag = 'output window, operand 0']
    %8 = vsyncpa [#allocation3], 0
    %s9 = scalar_lea.sflag [#allocation3], 1
    %10 = vsyncpa %s9, 0
    %11 = vsyncpa [#allocation4], 0
    %s12 = scalar_lea.sflag [#allocation4], 1
    %13 = vsyncpa %s12, 0
    loop: start=0, step=1, limit=4
    $region2: #{tpu_custom_call.1} parent=1 // loop_pre_header
      _
    $region3: #{tpu_custom_call.1} parent=1 // loop_header
      %s15 = sphi 0, %s19
      %p16 = scmp.ge.s32.totalorder %s15, 4
      %s25 = sphi 0, %s27
      %s28 = sphi 0, %s25
      %s29 = sphi 0, %s28
      %s45 = sphi 0, %s29
      %s49 = sphi 0, %s49
      %s51 = sphi 0, %s49
      %s52 = sphi 0, %s51
      %s66 = sphi 0, %s52
      %s70 = sphi 0, %s70
      %s72 = sphi 0, %s70
      %s73 = sphi 0, %s72
      %s87 = sphi 0, %s73
      %s93 = sphi 0, %s95
      %s96 = sphi 0, %s93
      %s97 = sphi 0, %s96
      %s113 = sphi 0, %s97
    $region4: #{tpu_custom_call.1} parent=1 // loop_header_branch
      %18 = sbr.rel (%p16) target = $region8
    $region5: #{tpu_custom_call.1} parent=1 // loop_body
      %s20 = ssub.s32 %s15, 1
      %s21 = ssub.s32 %s15, 2
      %s22 = sadd.s32 %s15, 1
      %s23 = ssub.s32 %s15, %s22
      %p24 = scmp.eq.s32.totalorder %s23, 0
      %s26 = sadd.s32 %s25, 1
      %s27 = scalar_select %p24, %s25, %s26
      %p30 = pneg %p24
      %p31 = scmp.eq.s32.totalorder %s15, 1
      %p32 = por %p30, %p31
      %p33 = scmp.ne.s32.totalorder %s25, %s28
      %p34 = scmp.eq.s32.totalorder %s15, 0
      %p35 = por %p33, %p34
      %p36 = scmp.ne.s32.totalorder %s25, %s28
      %p37 = scmp.eq.s32.totalorder %s20, 1
      %p38 = por %p36, %p37
      %p39 = scmp.ne.s32.totalorder %s28, %s29
      %p40 = scmp.eq.s32.totalorder %s20, 0
      %p41 = por %p39, %p40
      %p42 = scmp.ne.s32.totalorder %s28, %s29
      %p43 = scmp.eq.s32.totalorder %s21, 1
      %p44 = por %p42, %p43
      %p46 = scmp.ne.s32.totalorder %s29, %s45
      %p47 = scmp.eq.s32.totalorder %s21, 0
      %p48 = por %p46, %p47
      %s50 = sadd.s32 %s49, 1
      %p53 = scmp.eq.s32.totalorder %s15, 1
      %p54 = scmp.ne.s32.totalorder %s49, %s51
      %p55 = scmp.eq.s32.totalorder %s15, 0
      %p56 = por %p54, %p55
      %p57 = scmp.ne.s32.totalorder %s49, %s51
      %p58 = scmp.eq.s32.totalorder %s20, 1
      %p59 = por %p57, %p58
      %p60 = scmp.ne.s32.totalorder %s51, %s52
      %p61 = scmp.eq.s32.totalorder %s20, 0
      %p62 = por %p60, %p61
      %p63 = scmp.ne.s32.totalorder %s51, %s52
      %p64 = scmp.eq.s32.totalorder %s21, 1
      %p65 = por %p63, %p64
      %p67 = scmp.ne.s32.totalorder %s52, %s66
      %p68 = scmp.eq.s32.totalorder %s21, 0
      %p69 = por %p67, %p68
      %s71 = sadd.s32 %s70, 1
      %p74 = scmp.eq.s32.totalorder %s15, 1
      %p75 = scmp.ne.s32.totalorder %s70, %s72
      %p76 = scmp.eq.s32.totalorder %s15, 0
      %p77 = por %p75, %p76
      %p78 = scmp.ne.s32.totalorder %s70, %s72
      %p79 = scmp.eq.s32.totalorder %s20, 1
      %p80 = por %p78, %p79
      %p81 = scmp.ne.s32.totalorder %s72, %s73
      %p82 = scmp.eq.s32.totalorder %s20, 0
      %p83 = por %p81, %p82
      %p84 = scmp.ne.s32.totalorder %s72, %s73
      %p85 = scmp.eq.s32.totalorder %s21, 1
      %p86 = por %p84, %p85
      %p88 = scmp.ne.s32.totalorder %s73, %s87
      %p89 = scmp.eq.s32.totalorder %s21, 0
      %p90 = por %p88, %p89
      %s91 = ssub.s32 %s15, %s22
      %p92 = scmp.eq.s32.totalorder %s91, 0
      %s94 = sadd.s32 %s93, 1
      %s95 = scalar_select %p92, %s93, %s94
      %p98 = pneg %p92
      %p99 = scmp.eq.s32.totalorder %s15, 1
      %p100 = por %p98, %p99
      %p101 = scmp.ne.s32.totalorder %s93, %s96
      %p102 = scmp.eq.s32.totalorder %s15, 0
      %p103 = por %p101, %p102
      %p104 = scmp.ne.s32.totalorder %s93, %s96
      %p105 = scmp.eq.s32.totalorder %s20, 1
      %p106 = por %p104, %p105
      %p107 = scmp.ne.s32.totalorder %s96, %s97
      %p108 = scmp.eq.s32.totalorder %s20, 0
      %p109 = por %p107, %p108
      %p110 = scmp.ne.s32.totalorder %s96, %s97
      %p111 = scmp.eq.s32.totalorder %s21, 1
      %p112 = por %p110, %p111
      %p114 = scmp.ne.s32.totalorder %s97, %s113
      %p115 = scmp.eq.s32.totalorder %s21, 0
      %p116 = por %p114, %p115
      %p117 = scmp.le.s32.totalorder 1, %s15
      %p118 = scmp.lt.s32.totalorder %s15, 3
      %p119 = pnand %p117, %p118
      %p120 = pneg %p119
      // Predicated region
      $region9: #{tpu_custom_call.1} parent=5 // pred_check
        _
      $region10: #{tpu_custom_call.1} parent=5 // pred_check_branch
        %122 = sbr.rel (%p119) target = $region12
      $region11: #{tpu_custom_call.1} parent=5 // pred_region
        %s123 = ssub.s32 %s15, 1
        // Predicated region
        $region13: #{tpu_custom_call.1} parent=11 // pred_check
          %p124 = pneg %p62
        $region14: #{tpu_custom_call.1} parent=11 // pred_check_branch
          %126 = sbr.rel (%p124) target = $region16
        $region15: #{tpu_custom_call.1} parent=11 // pred_region
          _
        $region16: #{tpu_custom_call.1} parent=11 // pred_fallthru
          _
        // Predicated region
        $region17: #{tpu_custom_call.1} parent=11 // pred_check
          %p127 = pneg %p83
        $region18: #{tpu_custom_call.1} parent=11 // pred_check_branch
          %129 = sbr.rel (%p127) target = $region20
        $region19: #{tpu_custom_call.1} parent=11 // pred_region
          _
        $region20: #{tpu_custom_call.1} parent=11 // pred_fallthru
          _
      $region12: #{tpu_custom_call.1} parent=5 // pred_fallthru
        _
      %p130 = scmp.lt.s32.totalorder %s15, 2
      // Predicated region
      $region21: #{tpu_custom_call.1} parent=5 // pred_check
        %p131 = pneg %p130
      $region22: #{tpu_custom_call.1} parent=5 // pred_check_branch
        %133 = sbr.rel (%p131) target = $region24
      $region23: #{tpu_custom_call.1} parent=5 // pred_region
        // Predicated region
        $region25: #{tpu_custom_call.1} parent=23 // pred_check
          %p134 = pneg %p35
        $region26: #{tpu_custom_call.1} parent=23 // pred_check_branch
          %136 = sbr.rel (%p134) target = $region28
        $region27: #{tpu_custom_call.1} parent=23 // pred_region
          %s137 = sand.u32 %s25, 1
          %s138 = scalar_lea.sflag [#allocation3], %s137
          %s139 = sand.u32 %s25, 1
          %s140 = smul.addr %s139, 64
          %s141 = scalar_lea.vmem [#allocation2], %s140
          %s143 = ssub.s32 1024, 1024
          %144 = vsyncadd %s138, %s143
          %s145 = smul.addr %s15, 8
          %s146 = smul.addr %s145, 128
          %s147 = scalar_lea.hbm %s0, %s146
          %s148 = sshll.u32 %s141, 4
          %s149 = int_to_ptr.vmem [resolvable:$true] %s148
          %154 = dma.hbm_to_vmem [thread:$0]  %s147, 1024, %s149, %s138, 256, 256, 16
        $region28: #{tpu_custom_call.1} parent=23 // pred_fallthru
          _
      $region24: #{tpu_custom_call.1} parent=5 // pred_fallthru
        _
      %p155 = scmp.le.s32.totalorder 1, %s15
      %p156 = scmp.lt.s32.totalorder %s15, 3
      %p157 = pnand %p155, %p156
      %p158 = pneg %p157
      // Predicated region
      $region29: #{tpu_custom_call.1} parent=5 // pred_check
        _
      $region30: #{tpu_custom_call.1} parent=5 // pred_check_branch
        %160 = sbr.rel (%p157) target = $region32
      $region31: #{tpu_custom_call.1} parent=5 // pred_region
        %s161 = ssub.s32 %s15, 1
        %s162 = sand.u32 %s28, 1
        %s163 = scalar_lea.sflag [#allocation3], %s162
        %s164 = sand.u32 %s28, 1
        %s165 = smul.addr %s164, 64
        %s166 = scalar_lea.vmem [#allocation2], %s165
        // Predicated region
        $region33: #{tpu_custom_call.1} parent=31 // pred_check
          %p167 = pneg %p41
        $region34: #{tpu_custom_call.1} parent=31 // pred_check_branch
          %169 = sbr.rel (%p167) target = $region36
        $region35: #{tpu_custom_call.1} parent=31 // pred_region
          %170 = dma.done %s163, 1024
        $region36: #{tpu_custom_call.1} parent=31 // pred_fallthru
          _
        %s171 = sand.u32 %s28, 1
        %s172 = scalar_lea.sflag [#allocation3], %s171
        %s173 = sand.u32 %s28, 1
        %s174 = smul.addr %s173, 64
        %s175 = scalar_lea.vmem [#allocation2], %s174
        %p176 = pneg %p41
        %p177 = pneg %p38
        %p178 = pneg %p62
        %p179 = pneg %p59
        %p180 = pneg %p83
        %p181 = pneg %p80
        %p182 = pneg %p109
        %p183 = pneg %p106
        %s184 = sand.u32 %s96, 1
        %s185 = scalar_lea.sflag [#allocation4], %s184
        %s186 = sand.u32 %s96, 1
        %s187 = smul.addr %s186, 64
        %s188 = scalar_lea.vmem [#allocation5], %s187
        %v189 = vld [vmem:[%s166] sm:$0xff]
        %v190 = vld [vmem:[%s166 + $0x8] sm:$0xff]
        %v191 = vld [vmem:[%s166 + $0x10] sm:$0xff]
        %v192 = vld [vmem:[%s166 + $0x18] sm:$0xff]
        %v193 = vld [vmem:[%s166 + $0x20] sm:$0xff]
        %v194 = vld [vmem:[%s166 + $0x28] sm:$0xff]
        %v195 = vld [vmem:[%s166 + $0x30] sm:$0xff]
        %v196 = vld [vmem:[%s166 + $0x38] sm:$0xff]
        %v197 = vadd.f32 %v189, %v190
        %198 = vadd.xlane.f32.xlu0 %v197
        %v199 = vpop.xlane.xlu0 %198
        %v200 = vadd.f32 %v191, %v192
        %201 = vadd.xlane.f32.xlu0 %v200
        %v202 = vpop.xlane.xlu0 %201
        %v203 = vadd.f32 %v193, %v194
        %204 = vadd.xlane.f32.xlu0 %v203
        %v205 = vpop.xlane.xlu0 %204
        %v206 = vadd.f32 %v195, %v196
        %207 = vadd.xlane.f32.xlu0 %v206
        %v208 = vpop.xlane.xlu0 %207
        %v209 = vmul.f32 %v199, 0.00390625
        %v210 = vmul.f32 %v202, 0.00390625
        %v211 = vmul.f32 %v205, 0.00390625
        %v212 = vmul.f32 %v208, 0.00390625
        %v213 = vld [vmem:[%s1] sm:$0xff]
        %v214 = vld [vmem:[%s1 + $0x8] sm:$0xff]
        %v215 = vld [vmem:[%s1 + $0x10] sm:$0xff]
        %v216 = vld [vmem:[%s1 + $0x18] sm:$0xff]
        %v217 = vmul.f32 %v213, %v209
        %v218 = vmul.f32 %v214, %v210
        %v219 = vmul.f32 %v215, %v211
        %v220 = vmul.f32 %v216, %v212
        %vm221 = vcmask 64512
        %v222 = vsel %vm221, %v217, 0.0
        %v223 = vsel %vm221, %v218, 0.0
        %v224 = vadd.f32 %v222, %v223
        %v225 = vsel %vm221, %v219, 0.0
        %v226 = vadd.f32 %v224, %v225
        %v227 = vsel %vm221, %v220, 0.0
        %v228 = vadd.f32 %v226, %v227
        %v229 = vrot.slane %v228, 4
        %v230 = vadd.f32 %v228, %v229
        %v231 = vrot.slane %v230, 2
        %v232 = vadd.f32 %v230, %v231
        %v233 = vrot.slane %v232, 1
        %v234 = vadd.f32 %v232, %v233
        %v235 = vmax.f32 %v234, 0.0
        %v236 = vld [vmem:[%s2] sm:$0xff]
        %v237 = vld [vmem:[%s2 + $0x8] sm:$0xff]
        %v238 = vld [vmem:[%s2 + $0x10] sm:$0xff]
        %v239 = vld [vmem:[%s2 + $0x18] sm:$0xff]
        %v240 = vmul.f32 %v236, %v235
        %v241 = vmul.f32 %v237, %v235
        %v242 = vmul.f32 %v238, %v235
        %v243 = vmul.f32 %v239, %v235
        %v244 = vsel %vm221, %v240, 0.0
        %245 = vadd.xlane.f32.xlu0 %v244
        %v246 = vpop.xlane.xlu0 %245
        %v247 = vsel %vm221, %v241, 0.0
        %248 = vadd.xlane.f32.xlu0 %v247
        %v249 = vpop.xlane.xlu0 %248
        %v250 = vsel %vm221, %v242, 0.0
        %251 = vadd.xlane.f32.xlu0 %v250
        %v252 = vpop.xlane.xlu0 %251
        %v253 = vsel %vm221, %v243, 0.0
        %254 = vadd.xlane.f32.xlu0 %v253
        %v255 = vpop.xlane.xlu0 %254
        %v256 = vsub.f32 0.0, %v246
        %v257 = vsub.f32 0.0, %v249
        %v258 = vsub.f32 0.0, %v252
        %v259 = vsub.f32 0.0, %v255
        %v260 = vmul.f32 %v256, 1.442695
        %v261 = vpow.pop %v260
        %v262 = vmul.f32 %v257, 1.442695
        %v263 = vpow.pop %v262
        %v264 = vmul.f32 %v258, 1.442695
        %v265 = vpow.pop %v264
        %v266 = vmul.f32 %v259, 1.442695
        %v267 = vpow.pop %v266
        %v268 = vadd.f32 %v261, 1.0
        %v269 = vadd.f32 %v263, 1.0
        %v270 = vadd.f32 %v265, 1.0
        %v271 = vadd.f32 %v267, 1.0
        %v272 = vrcp.pop %v268
        %v273 = vmul.f32 1.0, %v272
        %v274 = vrcp.pop %v269
        %v275 = vmul.f32 1.0, %v274
        %v276 = vrcp.pop %v270
        %v277 = vmul.f32 1.0, %v276
        %v278 = vrcp.pop %v271
        %v279 = vmul.f32 1.0, %v278
        %v280 = vmul.f32 %v189, %v273
        %v281 = vmul.f32 %v190, %v273
        %v282 = vmul.f32 %v191, %v275
        %v283 = vmul.f32 %v192, %v275
        %v284 = vmul.f32 %v193, %v277
        %v285 = vmul.f32 %v194, %v277
        %v286 = vmul.f32 %v195, %v279
        %v287 = vmul.f32 %v196, %v279
        %288 = vst [vmem:[%s188] sm:$0xff] %v280
        %289 = vst [vmem:[%s188 + $0x8] sm:$0xff] %v281
        %290 = vst [vmem:[%s188 + $0x10] sm:$0xff] %v282
        %291 = vst [vmem:[%s188 + $0x18] sm:$0xff] %v283
        %292 = vst [vmem:[%s188 + $0x20] sm:$0xff] %v284
        %293 = vst [vmem:[%s188 + $0x28] sm:$0xff] %v285
        %294 = vst [vmem:[%s188 + $0x30] sm:$0xff] %v286
        %295 = vst [vmem:[%s188 + $0x38] sm:$0xff] %v287
        %s296 = sand.u32 %s96, 1
        %s297 = scalar_lea.sflag [#allocation4], %s296
        %s298 = sand.u32 %s96, 1
        %s299 = smul.addr %s298, 64
        %s300 = scalar_lea.vmem [#allocation5], %s299
        // Predicated region
        $region37: #{tpu_custom_call.1} parent=31 // pred_check
          %p301 = pneg %p106
        $region38: #{tpu_custom_call.1} parent=31 // pred_check_branch
          %303 = sbr.rel (%p301) target = $region40
        $region39: #{tpu_custom_call.1} parent=31 // pred_region
          %s305 = ssub.s32 1024, 1024
          %306 = vsyncadd %s297, %s305
          %s307 = smul.addr %s20, 8
          %s308 = smul.addr %s307, 128
          %s309 = scalar_lea.hbm %s3, %s308
          %s310 = sshll.u32 %s300, 4
          %s311 = int_to_ptr.vmem [resolvable:$true] %s310
          %316 = dma.vmem_to_hbm [thread:$0]  %s311, 1024, %s309, %s297, 256, 256, 16
        $region40: #{tpu_custom_call.1} parent=31 // pred_fallthru
          _
      $region32: #{tpu_custom_call.1} parent=5 // pred_fallthru
        _
      %p317 = scmp.le.s32.totalorder 2, %s15
      // Predicated region
      $region41: #{tpu_custom_call.1} parent=5 // pred_check
        %p318 = pneg %p317
      $region42: #{tpu_custom_call.1} parent=5 // pred_check_branch
        %320 = sbr.rel (%p318) target = $region44
      $region43: #{tpu_custom_call.1} parent=5 // pred_region
        %s321 = ssub.s32 %s15, 2
        // Predicated region
        $region45: #{tpu_custom_call.1} parent=43 // pred_check
          %p322 = pneg %p112
        $region46: #{tpu_custom_call.1} parent=43 // pred_check_branch
          %324 = sbr.rel (%p322) target = $region48
        $region47: #{tpu_custom_call.1} parent=43 // pred_region
          %s325 = sand.u32 %s97, 1
          %s326 = scalar_lea.sflag [#allocation4], %s325
          %s327 = sand.u32 %s97, 1
          %s328 = smul.addr %s327, 64
          %s329 = scalar_lea.vmem [#allocation5], %s328
          %330 = dma.done %s326, 1024
        $region48: #{tpu_custom_call.1} parent=43 // pred_fallthru
          _
      $region44: #{tpu_custom_call.1} parent=5 // pred_fallthru
        _
    $region6: #{tpu_custom_call.1} parent=1 // loop_footer
      %s19 = sadd.s32 1, %s15
    $region7: #{tpu_custom_call.1} parent=1 // loop_footer_branch
      %14 = sbr.rel target = $region3
    $region8: #{tpu_custom_call.1} parent=1 // loop_exit
      _
    %331 = vsyncpa [#allocation3], 1
    %s332 = scalar_lea.sflag [#allocation3], 1
    %333 = vsyncpa %s332, 1
    %334 = vsyncpa [#allocation4], 1
    %s335 = scalar_lea.sflag [#allocation4], 1
    %336 = vsyncpa %s335, 1

</llo_original>
